<compile_context>
chip_gen: v7x
topology: tpu7x:2x2x1
jax: 0.10.0
libtpu: 0.0.40
codegen_flags: <defaults>
</compile_context>

<pallas_src>
import functools

import jax
import jax.numpy as jnp
from jax.experimental import pallas as pl
from jax.experimental.pallas import tpu as pltpu

_LANE = 128
_SUBLANE = 8


def _round_up(n, m):
    return ((n + m - 1) // m) * m


def _pad_to(a, shape):
    pads = [(0, t - s) for s, t in zip(a.shape, shape)]
    if any(p[1] for p in pads):
        a = jnp.pad(a, pads)
    return a


# ---------------------------------------------------------------------------
# Hardware introspection (generation-aware tiling / VMEM budget).
# ---------------------------------------------------------------------------
def _device_kind():
    try:
        return jax.devices()[0].device_kind.lower()
    except Exception:
        return ""


def _vmem_capacity_bytes():
    try:
        cap = getattr(pltpu.get_tpu_info(), "vmem_capacity_bytes", None)
        if cap:
            return int(cap)
    except Exception:
        pass
    kind = _device_kind()
    if "v7" in kind or "7x" in kind:
        return 64 << 20          # v7x: 64 MiB per TensorCore
    return 128 << 20             # v5e / v6e


def _supports_bf16_epilogue():
    # v6e/v7x VPUs handle bf16 elementwise; v5e (and older) do not.
    kind = _device_kind()
    return any(tag in kind for tag in ("v6", "v7", "7x"))


@functools.lru_cache(maxsize=None)
def _single_buffer_supported():
    """Feature-detect pipeline_mode=pl.Buffered(1) with a one-time probe compile.

    Narrow, deterministic check that replaces the old broad try/except around
    the real pallas_call (which could swallow genuine lowering errors).
    """
    if not hasattr(pl, "Buffered"):
        return False
    try:
        w_spec = pl.BlockSpec((8, 128), lambda i: (0, 0),
                              pipeline_mode=pl.Buffered(1))

        def probe(w_ref, o_ref):
            o_ref[...] = w_ref[...] * 2.0

        fn = pl.pallas_call(
            probe,
            out_shape=jax.ShapeDtypeStruct((8, 128), jnp.float32),
            grid=(2,),
            in_specs=[w_spec],
            out_specs=pl.BlockSpec((8, 128), lambda i: (0, 0)),
        )
        jax.jit(fn).lower(jax.ShapeDtypeStruct((8, 128), jnp.float32)).compile()
        return True
    except Exception:
        return False


# ---------------------------------------------------------------------------
# Kernel.
# ---------------------------------------------------------------------------
def _make_mlp_kernel(hidden_bf16):
    h_dtype = jnp.bfloat16 if hidden_bf16 else jnp.float32

    def mlp_kernel(x_ref, w1_ref, b1_ref, w2_ref, b2_ref, o_ref):
        # Cast f32 activations to the MXU dtype in-kernel (VPU slot, hidden
        # under the MXU / DMA) instead of a separate XLA pad+convert pass.
        x = x_ref[...].astype(w1_ref.dtype)
        # fc1: MXU matmul (f32 accumulation inside the MXU); on v6e/v7x the
        # bias+ReLU epilogue stays bf16 to halve the hidden intermediate.
        h = jnp.dot(x, w1_ref[...], preferred_element_type=h_dtype)
        h = jnp.maximum(h + b1_ref[...], 0.0).astype(w2_ref.dtype)
        # fc2: f32 accumulation, f32 bias.
        y = jnp.dot(h, w2_ref[...], preferred_element_type=jnp.float32)
        o_ref[...] = (y + b2_ref[...]).astype(o_ref.dtype)

    return mlp_kernel


# ---------------------------------------------------------------------------
# One-time parameter preparation (hoisted out of the per-call path).
# ---------------------------------------------------------------------------
def prepare_params(w1, b1, w2, b2, *, mxu_dtype=jnp.bfloat16, hidden_bf16=None):
    """Pad hidden/output dims to 128 lanes and cast to the MXU dtype, once.

    Reuse the returned dict across forwards so the per-call path never pays
    another HBM pass over the weight matrices.
    """
    if hidden_bf16 is None:
        hidden_bf16 = _supports_bf16_epilogue()
    num_inputs, num_hiddens = w1.shape
    num_outputs = w2.shape[1]
    hp = _round_up(num_hiddens, _LANE)
    np_ = _round_up(num_outputs, _LANE)
    # TODO(synk): if the real hidden/output dims are >=256, round hp/np_ to
    # multiples of 256 so each push fills the full 2x256x256 MXU on v6e/v7x.
    b1_dtype = mxu_dtype if hidden_bf16 else jnp.float32
    return {
        "w1": _pad_to(w1.astype(mxu_dtype), (num_inputs, hp)),
        "b1": _pad_to(b1.astype(b1_dtype).reshape(1, num_hiddens), (1, hp)),
        "w2": _pad_to(w2.astype(mxu_dtype), (hp, np_)),
        "b2": _pad_to(b2.astype(jnp.float32).reshape(1, num_outputs), (1, np_)),
        "dims": (num_inputs, num_hiddens, num_outputs),
        "hidden_bf16": bool(hidden_bf16),
        "mxu_dtype": jnp.dtype(mxu_dtype),
    }


# ---------------------------------------------------------------------------
# Forward.
# ---------------------------------------------------------------------------
def custom_network_forward(x, params, *, block_b=None, out_dtype=jnp.float32):
    """Fused fc1 -> ReLU -> fc2.  x: (B, num_inputs) -> (B, num_outputs)."""
    num_inputs, num_hiddens, num_outputs = params["dims"]
    B, k = x.shape
    assert k == num_inputs, (k, num_inputs)
    w1p, b1p, w2p, b2p = params["w1"], params["b1"], params["w2"], params["b2"]
    hp, np_ = w1p.shape[1], w2p.shape[1]
    hidden_bf16 = params["hidden_bf16"]
    isz = params["mxu_dtype"].itemsize
    x_isz = x.dtype.itemsize
    out_isz = jnp.dtype(out_dtype).itemsize

    single_buf = _single_buffer_supported()
    wf = 1 if single_buf else 2                       # weight buffer count
    b1_isz = isz if hidden_bf16 else 4
    weight_bytes = wf * ((num_inputs * hp + hp * np_) * isz
                         + hp * b1_isz + np_ * 4)

    # Per batch-row VMEM: double-buffered x tile, its in-kernel bf16 copy,
    # the hidden intermediate, and the double-buffered output tile.
    per_row = (2 * num_inputs * x_isz + num_inputs * isz
               + 2 * np_ * out_isz
               + hp * (isz if hidden_bf16 else 4 + isz))

    vmem_cap = _vmem_capacity_bytes()
    vmem_target = (40 << 20) if vmem_cap <= (64 << 20) else (96 << 20)

    bp0 = _round_up(B, _SUBLANE)
    if block_b is None:
        avail = max(vmem_target - weight_bytes, 1 << 20)
        block_b = max(_SUBLANE, (avail // 2) // per_row)   # 2x headroom
        block_b = min(block_b, 2048, bp0)
        if bp0 >= 2 * _SUBLANE:
            # >= 2 grid steps so both v7x TensorCores get work on the
            # "parallel" batch axis (harmless on single-TC v5e/v6e).
            block_b = min(block_b, _round_up((bp0 + 1) // 2, _SUBLANE))
    block_b = max(_SUBLANE, (int(block_b) // _SUBLANE) * _SUBLANE)
    block_b = min(block_b, bp0)

    bp = _round_up(B, block_b)                        # row-only pad (cheap)
    grid = (bp // block_b,)

    need = weight_bytes + block_b * per_row
    vmem_limit = int(min(max(need + need // 2, 8 << 20), vmem_target))

    xp = _pad_to(x, (bp, num_inputs))                 # K stays native (no 128 pad)

    def const_spec(shape):
        index_map = lambda i: (0,) * len(shape)
        if single_buf:
            # Grid-invariant operand: one resident copy is enough.
            return pl.BlockSpec(shape, index_map, pipeline_mode=pl.Buffered(1))
        return pl.BlockSpec(shape, index_map)

    flops = 2 * B * (num_inputs * num_hiddens + num_hiddens * num_outputs)
    bytes_accessed = (B * num_inputs * x_isz
                      + (num_inputs * hp + hp * np_) * isz
                      + hp * b1_isz + np_ * 4
                      + bp * np_ * out_isz)

    # TODO(synk): add a K/H reduction grid axis ("arbitrary") with an f32 VMEM
    # accumulator once (K*hp + hp*np_)*isz approaches vmem_target (~4k-square
    # layers on v7x, ~5.5k on v5e/v6e); the resident-weight design cannot
    # compile beyond that.
    out_padded = pl.pallas_call(
        _make_mlp_kernel(hidden_bf16),
        out_shape=jax.ShapeDtypeStruct((bp, np_), out_dtype),
        grid_spec=pltpu.PrefetchScalarGridSpec(
            num_scalar_prefetch=0,
            grid=grid,
            in_specs=[
                # TODO(synk): bump to pipeline_mode=pl.Buffered(3) if profiling
                # shows exposed x DMA at small block_b.
                pl.BlockSpec((block_b, num_inputs), lambda i: (i, 0)),
                const_spec((num_inputs, hp)),
                const_spec((1, hp)),
                const_spec((hp, np_)),
                const_spec((1, np_)),
            ],
            out_specs=pl.BlockSpec((block_b, np_), lambda i: (i, 0)),
        ),
        compiler_params=pltpu.CompilerParams(
            dimension_semantics=("parallel",),
            vmem_limit_bytes=vmem_limit,
        ),
        cost_estimate=pl.CostEstimate(
            flops=flops, transcendentals=0, bytes_accessed=bytes_accessed),
    )(xp, w1p, b1p, w2p, b2p)

    return out_padded[:B, :num_outputs]


# ---------------------------------------------------------------------------
# References.
# ---------------------------------------------------------------------------
def reference_forward_f32(x, w1, b1, w2, b2):
    h = jnp.maximum(x @ w1 + b1, 0.0)
    return h @ w2 + b2


def reference_forward_mxu(x, w1, b1, w2, b2, hidden_bf16):
    # Same rounding points as the kernel: bf16 MXU operands, f32 accumulation,
    # hidden epilogue in bf16 (v6e/v7x) or f32 (v5e).
    h_dtype = jnp.bfloat16 if hidden_bf16 else jnp.float32
    h = jnp.dot(x.astype(jnp.bfloat16), w1.astype(jnp.bfloat16),
                preferred_element_type=h_dtype)
    h = jnp.maximum(h + b1.astype(h_dtype), 0.0)
    y = jnp.dot(h.astype(jnp.bfloat16), w2.astype(jnp.bfloat16),
                preferred_element_type=jnp.float32)
    return y + b2


if __name__ == "__main__":
    # Small shapes consistent with the module's flat-vector forward.
    num_inputs, num_hiddens, num_outputs = 32, 64, 16

    key = jax.random.PRNGKey(0)
    kx, kw1, kb1, kw2, kb2, kx2 = jax.random.split(key, 6)

    w1 = jax.random.normal(kw1, (num_inputs, num_hiddens), jnp.float32) * (1.0 / num_inputs ** 0.5)
    b1 = jax.random.normal(kb1, (num_hiddens,), jnp.float32) * 0.01
    w2 = jax.random.normal(kw2, (num_hiddens, num_outputs), jnp.float32) * (1.0 / num_hiddens ** 0.5)
    b2 = jax.random.normal(kb2, (num_outputs,), jnp.float32) * 0.01

    # One-time weight prep (padding + bf16 casting hoisted out of the call path).
    params = prepare_params(w1, b1, w2, b2)
    hidden_bf16 = params["hidden_bf16"]

    # Case 1: tiny batch, single grid block (auto tiling).
    x = jax.random.normal(kx, (8, num_inputs), jnp.float32)
    out = jax.block_until_ready(custom_network_forward(x, params))
    assert out.shape == (8, num_outputs) and out.dtype == jnp.float32
    ref_mxu = reference_forward_mxu(x, w1, b1, w2, b2, hidden_bf16)
    assert jnp.allclose(out, ref_mxu, atol=2e-2, rtol=2e-2), "mismatch vs mxu reference"
    assert jnp.allclose(out, reference_forward_f32(x, w1, b1, w2, b2),
                        atol=1e-1, rtol=1e-1), "mismatch vs f32 reference"

    # Case 2: batch not a multiple of the tile -> row-padded batch plus a
    # multi-block "parallel" grid (exercises the pipelined / megacore path).
    x2 = jax.random.normal(kx2, (20, num_inputs), jnp.float32)
    out2 = jax.block_until_ready(custom_network_forward(x2, params, block_b=8))
    assert out2.shape == (20, num_outputs)
    ref2_mxu = reference_forward_mxu(x2, w1, b1, w2, b2, hidden_bf16)
    assert jnp.allclose(out2, ref2_mxu, atol=2e-2, rtol=2e-2), "mismatch vs mxu reference (case 2)"
    assert jnp.allclose(out2, reference_forward_f32(x2, w1, b1, w2, b2),
                        atol=1e-1, rtol=1e-1), "mismatch vs f32 reference (case 2)"

    print("KERNEL_OK")
</pallas_src>

<mosaic_0001>
module attributes {stable_mosaic.version = 11 : i64} {
  func.func @mlp_kernel(%arg0: i32, %arg1: memref<8x32xf32, #tpu.memory_space<vmem>>, %arg2: memref<32x128xbf16, #tpu.memory_space<vmem>>, %arg3: memref<1x128xf32, #tpu.memory_space<vmem>>, %arg4: memref<128x128xbf16, #tpu.memory_space<vmem>>, %arg5: memref<1x128xf32, #tpu.memory_space<vmem>>, %arg6: memref<8x128xf32, #tpu.memory_space<vmem>>) attributes {dimension_semantics = [#tpu.dimension_semantics<parallel>], iteration_bounds = array<i64: 1>, scalar_prefetch = 0 : i64, scratch_operands = 0 : i64, tpu.core_type = #tpu.core_type<tc>, window_params = [{transform_indices = @transform_0, window_bounds = array<i64: 8, 32>}, {pipeline_mode = #tpu.pipeline_mode<synchronous>, transform_indices = @transform_1, window_bounds = array<i64: 32, 128>}, {pipeline_mode = #tpu.pipeline_mode<synchronous>, transform_indices = @transform_2, window_bounds = array<i64: 1, 128>}, {pipeline_mode = #tpu.pipeline_mode<synchronous>, transform_indices = @transform_3, window_bounds = array<i64: 128, 128>}, {pipeline_mode = #tpu.pipeline_mode<synchronous>, transform_indices = @transform_4, window_bounds = array<i64: 1, 128>}, {transform_indices = @transform_5, window_bounds = array<i64: 8, 128>}]} {
    %c0 = arith.constant 0 : index
    %c0_0 = arith.constant 0 : index
    %0 = vector.load %arg1[%c0, %c0_0] : memref<8x32xf32, #tpu.memory_space<vmem>>, vector<8x32xf32>
    %1 = arith.truncf %0 : vector<8x32xf32> to vector<8x32xbf16>
    %c0_1 = arith.constant 0 : index
    %c0_2 = arith.constant 0 : index
    %2 = vector.load %arg2[%c0_1, %c0_2] : memref<32x128xbf16, #tpu.memory_space<vmem>>, vector<32x128xbf16>
    %cst = arith.constant dense<0.000000e+00> : vector<8x128xf32>
    %3 = tpu.matmul %1, %2, %cst {dimension_numbers = #tpu.dot_dimension_numbers<[1], [0], [0], [1], [0, 0, 1, 1], [], []>} : vector<8x32xbf16>, vector<32x128xbf16>, vector<8x128xf32> -> vector<8x128xf32>
    %c0_3 = arith.constant 0 : index
    %c0_4 = arith.constant 0 : index
    %4 = vector.load %arg3[%c0_3, %c0_4] : memref<1x128xf32, #tpu.memory_space<vmem>>, vector<1x128xf32>
    %5 = vector.broadcast %4 : vector<1x128xf32> to vector<8x128xf32>
    %6 = arith.addf %3, %5 : vector<8x128xf32>
    %cst_5 = arith.constant 0.000000e+00 : f32
    %7 = vector.broadcast %cst_5 : f32 to vector<8x128xf32>
    %8 = arith.maximumf %6, %7 : vector<8x128xf32>
    %9 = arith.truncf %8 : vector<8x128xf32> to vector<8x128xbf16>
    %c0_6 = arith.constant 0 : index
    %c0_7 = arith.constant 0 : index
    %10 = vector.load %arg4[%c0_6, %c0_7] : memref<128x128xbf16, #tpu.memory_space<vmem>>, vector<128x128xbf16>
    %cst_8 = arith.constant dense<0.000000e+00> : vector<8x128xf32>
    %11 = tpu.matmul %9, %10, %cst_8 {dimension_numbers = #tpu.dot_dimension_numbers<[1], [0], [0], [1], [0, 0, 1, 1], [], []>} : vector<8x128xbf16>, vector<128x128xbf16>, vector<8x128xf32> -> vector<8x128xf32>
    %c0_9 = arith.constant 0 : index
    %c0_10 = arith.constant 0 : index
    %12 = vector.load %arg5[%c0_9, %c0_10] : memref<1x128xf32, #tpu.memory_space<vmem>>, vector<1x128xf32>
    %13 = vector.broadcast %12 : vector<1x128xf32> to vector<8x128xf32>
    %14 = arith.addf %11, %13 : vector<8x128xf32>
    %c0_11 = arith.constant 0 : index
    %c0_12 = arith.constant 0 : index
    %15 = vector.load %arg6[%c0_11, %c0_12] : memref<8x128xf32, #tpu.memory_space<vmem>>, vector<8x128xf32>
    tpu.vector_store %arg6[%c0_11, %c0_12], %14 {strides = array<i32>} : memref<8x128xf32, #tpu.memory_space<vmem>>, vector<8x128xf32>,
    return
  }
  func.func @transform_0(%arg0: i32) -> (i32, i32) {
    %c0_i32 = arith.constant 0 : i32
    %c0_i32_0 = arith.constant 0 : i32
    return %arg0, %c0_i32 : i32, i32
  }
  func.func @transform_1(%arg0: i32) -> (i32, i32) {
    %c0_i32 = arith.constant 0 : i32
    %c0_i32_0 = arith.constant 0 : i32
    %c0_i32_1 = arith.constant 0 : i32
    return %c0_i32, %c0_i32_0 : i32, i32
  }
  func.func @transform_2(%arg0: i32) -> (i32, i32) {
    %c0_i32 = arith.constant 0 : i32
    %c0_i32_0 = arith.constant 0 : i32
    %c0_i32_1 = arith.constant 0 : i32
    return %c0_i32, %c0_i32_0 : i32, i32
  }
  func.func @transform_3(%arg0: i32) -> (i32, i32) {
    %c0_i32 = arith.constant 0 : i32
    %c0_i32_0 = arith.constant 0 : i32
    %c0_i32_1 = arith.constant 0 : i32
    return %c0_i32, %c0_i32_0 : i32, i32
  }
  func.func @transform_4(%arg0: i32) -> (i32, i32) {
    %c0_i32 = arith.constant 0 : i32
    %c0_i32_0 = arith.constant 0 : i32
    %c0_i32_1 = arith.constant 0 : i32
    return %c0_i32, %c0_i32_0 : i32, i32
  }
  func.func @transform_5(%arg0: i32) -> (i32, i32) {
    %c0_i32 = arith.constant 0 : i32
    %c0_i32_0 = arith.constant 0 : i32
    return %arg0, %c0_i32 : i32, i32
  }
}

</mosaic_0001>

<llo_original>
// kernel: tpu_custom_call.1
$region0: #{tpu_custom_call.1}
  #allocation0 [shape = 'u32[]', space=smem, size = 0x4, offset = 0x4, fixed_abs, tag = 'smem constant byte address 0x4 - core index']
  #allocation1 [shape = 'u32[144,128]{1,0:T(1,128)}', space=vmem, size = 0x12000, scoped, tag = 'internal scratch']
  %s0 = inlined_call_operand.hbm [shape: f32[8,32], index: 0, kind: input, shape index: {}]
  %s1 = inlined_call_operand.hbm [shape: bf16[32,128], index: 1, kind: input, shape index: {}]
  %s2 = inlined_call_operand.vmem [shape: f32[1,128], index: 2, kind: input, shape index: {}]
  %s3 = inlined_call_operand.hbm [shape: bf16[128,128], index: 3, kind: input, shape index: {}]
  %s4 = inlined_call_operand.vmem [shape: f32[1,128], index: 4, kind: input, shape index: {}]
  %s5 = inlined_call_operand.hbm [shape: f32[8,128], index: 5, kind: output, shape index: {}]
  %s6 = sld [smem:[#allocation0]]
  $region42: #{tpu_custom_call.1} parent=0
    _
  %s8 = ssub.s32 1, %s6
  %s9 = scalar_select 0, %s8, %s6
  $region1: #{tpu_custom_call.1} parent=0
    #allocation2 [shape = 'u8[4096]{0}', space=vmem, size = 0x1000, scoped, tag = 'input window, operand 0, single buffered']
    #allocation3 [shape = 's32[1]{0}', space=sflag, size = 0x4, scoped, tag = 'scoped memory for tpu_custom_call.1']
    #allocation4 [shape = 's32[1]{0}', space=sflag, size = 0x4, scoped, tag = 'scoped memory for tpu_custom_call.1']
    #allocation5 [shape = 'u8[8192]{0}', space=vmem, size = 0x2000, scoped, tag = 'input window, operand 1, single buffered']
    #allocation6 [shape = 's32[1]{0}', space=sflag, size = 0x4, scoped, tag = 'scoped memory for tpu_custom_call.1']
    #allocation7 [shape = 'u8[32768]{0}', space=vmem, size = 0x8000, scoped, tag = 'input window, operand 3, single buffered']
    #allocation8 [shape = 'u8[4096]{0}', space=vmem, size = 0x1000, scoped, tag = 'output window, operand 0, single buffered']
    %10 = vsyncpa [#allocation3], 0
    %11 = vsyncpa [#allocation6], 0
    %12 = vsyncpa [#allocation4], 0
    // Predicated region
    $region2: #{tpu_custom_call.1} parent=1 // pred_check
      _
    $region3: #{tpu_custom_call.1} parent=1 // pred_check_branch
      %14 = sbr.rel (0) target = $region5
    $region4: #{tpu_custom_call.1} parent=1 // pred_region
      %s16 = ssub.s32 128, 128
      %17 = vsyncadd [#allocation3], %s16
      %s19 = sshll.u32 [#allocation2], 4
      %s20 = int_to_ptr.vmem [resolvable:$true] %s19
      %22 = dma.hbm_to_vmem [thread:$0]  %s0, 128, %s20, [#allocation3]
    $region5: #{tpu_custom_call.1} parent=1 // pred_fallthru
      _
    // Predicated region
    $region6: #{tpu_custom_call.1} parent=1 // pred_check
      _
    $region7: #{tpu_custom_call.1} parent=1 // pred_check_branch
      %24 = sbr.rel (0) target = $region9
    $region8: #{tpu_custom_call.1} parent=1 // pred_region
      %s26 = ssub.s32 256, 256
      %27 = vsyncadd [#allocation6], %s26
      %s28 = sshll.u32 [#allocation5], 4
      %s29 = int_to_ptr.vmem [resolvable:$true] %s28
      %34 = dma.hbm_to_vmem [thread:$0]  %s1, 256, %s29, [#allocation6], 64, 64, 4
    $region9: #{tpu_custom_call.1} parent=1 // pred_fallthru
      _
    // Predicated region
    $region10: #{tpu_custom_call.1} parent=1 // pred_check
      _
    $region11: #{tpu_custom_call.1} parent=1 // pred_check_branch
      %36 = sbr.rel (0) target = $region13
    $region12: #{tpu_custom_call.1} parent=1 // pred_region
      _
    $region13: #{tpu_custom_call.1} parent=1 // pred_fallthru
      _
    // Predicated region
    $region14: #{tpu_custom_call.1} parent=1 // pred_check
      _
    $region15: #{tpu_custom_call.1} parent=1 // pred_check_branch
      %38 = sbr.rel (0) target = $region17
    $region16: #{tpu_custom_call.1} parent=1 // pred_region
      %s40 = ssub.s32 1024, 1024
      %41 = vsyncadd [#allocation6], %s40
      %s42 = sshll.u32 [#allocation7], 4
      %s43 = int_to_ptr.vmem [resolvable:$true] %s42
      %48 = dma.hbm_to_vmem [thread:$0]  %s3, 1024, %s43, [#allocation6], 64, 64, 4
    $region17: #{tpu_custom_call.1} parent=1 // pred_fallthru
      _
    // Predicated region
    $region18: #{tpu_custom_call.1} parent=1 // pred_check
      _
    $region19: #{tpu_custom_call.1} parent=1 // pred_check_branch
      %50 = sbr.rel (0) target = $region21
    $region20: #{tpu_custom_call.1} parent=1 // pred_region
      _
    $region21: #{tpu_custom_call.1} parent=1 // pred_fallthru
      _
    // Predicated region
    $region22: #{tpu_custom_call.1} parent=1 // pred_check
      _
    $region23: #{tpu_custom_call.1} parent=1 // pred_check_branch
      %52 = sbr.rel (0) target = $region25
    $region24: #{tpu_custom_call.1} parent=1 // pred_region
      %53 = dma.done [#allocation3], 128
    $region25: #{tpu_custom_call.1} parent=1 // pred_fallthru
      _
    // Predicated region
    $region26: #{tpu_custom_call.1} parent=1 // pred_check
      _
    $region27: #{tpu_custom_call.1} parent=1 // pred_check_branch
      %55 = sbr.rel (0) target = $region29
    $region28: #{tpu_custom_call.1} parent=1 // pred_region
      %56 = dma.done [#allocation6], 256
    $region29: #{tpu_custom_call.1} parent=1 // pred_fallthru
      _
    // Predicated region
    $region30: #{tpu_custom_call.1} parent=1 // pred_check
      _
    $region31: #{tpu_custom_call.1} parent=1 // pred_check_branch
      %58 = sbr.rel (0) target = $region33
    $region32: #{tpu_custom_call.1} parent=1 // pred_region
      %59 = dma.done [#allocation6], 1024
    $region33: #{tpu_custom_call.1} parent=1 // pred_fallthru
      _
    %v61 = vld [vmem:[#allocation2] sm:$0xff]
    %v62 = vpack.c.bf16 %v61, %v61
    %v63 = vld [vmem:[#allocation5] sm:$0xf]
    %v64 = vld [vmem:[#allocation5 + $0x4] sm:$0xf]
    %v65 = vld [vmem:[#allocation5 + $0x8] sm:$0xf]
    %v66 = vld [vmem:[#allocation5 + $0xc] sm:$0xf]
    %v67 = vld [vmem:[%s2] sm:$0x1]
    %v69 = vlaneseq
    %v70 = vshrl.u32 %v69, 7
    %v71 = vsub.s32 0, %v70
    %v72 = vrot.slane %v67, %v71
    %v78 = vunpack.c.l.b16 %v63
    %v79 = vunpack.c.l.b16 %v64
    %v80 = vunpack.c.l.b16 %v65
    %v81 = vunpack.c.l.b16 %v66
    %v82 = vpack.c.b16 %v79, %v78
    %v83 = vpack.c.b16 %v81, %v80
    %vm86 = vcmask 261120
    %v88 = vsel %vm86, %v62, 0
    %90 = vmatprep.subr.bf16.mxu0 0
    %91 = vmatpush1.bf16.msra.mxu0 %v82
    %92 = vmatprep.subr.bf16.mxu0 0
    %93 = vmatpush1.bf16.msra.mxu0 %v83
    %94 = vmatprep.subr.bf16.mxu0 0
    %95 = vmatpush1.bf16.msra.mxu0 0
    %96 = vmatprep.subr.bf16.mxu0 0
    %97 = vmatpush1.bf16.msra.mxu0 0
    %98 = vmatprep.subr.bf16.mxu0 0
    %99 = vmatpush1.bf16.msra.mxu0 0
    %100 = vmatprep.subr.bf16.mxu0 0
    %101 = vmatpush1.bf16.msra.mxu0 0
    %102 = vmatprep.subr.bf16.mxu0 0
    %103 = vmatpush1.bf16.msra.mxu0 0
    %104 = vmatprep.subr.bf16.mxu0 0
    %105 = vmatpush1.bf16.msra.mxu0 0
    %106 = vmatprep.subr.bf16.mxu0 0
    %107 = vmatpush1.bf16.msra.mxu0 0
    %108 = vmatprep.subr.bf16.mxu0 0
    %109 = vmatpush1.bf16.msra.mxu0 0
    %110 = vmatprep.subr.bf16.mxu0 0
    %111 = vmatpush1.bf16.msra.mxu0 0
    %112 = vmatprep.subr.bf16.mxu0 0
    %113 = vmatpush1.bf16.msra.mxu0 0
    %114 = vmatprep.subr.bf16.mxu0 0
    %115 = vmatpush1.bf16.msra.mxu0 0
    %116 = vmatprep.subr.bf16.mxu0 0
    %117 = vmatpush1.bf16.msra.mxu0 0
    %118 = vmatprep.subr.bf16.mxu0 0
    %119 = vmatpush1.bf16.msra.mxu0 0
    %120 = vmatprep.subr.bf16.mxu0 0
    %121 = vmatpush1.bf16.msra.mxu0 0
    %122 = vmatprep.mubr.bf16.mxu0 0
    %123 = vmatmul.mubr.bf16.gmra.mrb[0].mxu0 %v88
    %v124 = vpop.f32.mrb[0].mxu0
    %v125 = vadd.f32 %v72, %v124
    %v126 = vpop.f32.mrb[0].mxu0
    %v127 = vpop.f32.mrb[0].mxu0
    %v128 = vpop.f32.mrb[0].mxu0
    %129 = vdwg.mxu0
    %v130 = vmax.f32 %v125, 0.0
    %v131 = vpack.c.bf16 %v130, %v130
    %v132 = vld [vmem:[#allocation7] sm:$0xf]
    %v133 = vld [vmem:[#allocation7 + $0x4] sm:$0xf]
    %v134 = vld [vmem:[#allocation7 + $0x8] sm:$0xf]
    %v135 = vld [vmem:[#allocation7 + $0xc] sm:$0xf]
    %v136 = vld [vmem:[#allocation7 + $0x10] sm:$0xf]
    %v137 = vld [vmem:[#allocation7 + $0x14] sm:$0xf]
    %v138 = vld [vmem:[#allocation7 + $0x18] sm:$0xf]
    %v139 = vld [vmem:[#allocation7 + $0x1c] sm:$0xf]
    %v140 = vld [vmem:[#allocation7 + $0x20] sm:$0xf]
    %v141 = vld [vmem:[#allocation7 + $0x24] sm:$0xf]
    %v142 = vld [vmem:[#allocation7 + $0x28] sm:$0xf]
    %v143 = vld [vmem:[#allocation7 + $0x2c] sm:$0xf]
    %v144 = vld [vmem:[#allocation7 + $0x30] sm:$0xf]
    %v145 = vld [vmem:[#allocation7 + $0x34] sm:$0xf]
    %v146 = vld [vmem:[#allocation7 + $0x38] sm:$0xf]
    %v147 = vld [vmem:[#allocation7 + $0x3c] sm:$0xf]
    %v148 = vld [vmem:[%s4] sm:$0x1]
    %v150 = vlaneseq
    %v151 = vshrl.u32 %v150, 7
    %v152 = vsub.s32 0, %v151
    %v153 = vrot.slane %v148, %v152
    %v171 = vunpack.c.l.b16 %v132
    %v172 = vunpack.c.l.b16 %v133
    %v173 = vunpack.c.l.b16 %v134
    %v174 = vunpack.c.l.b16 %v135
    %v175 = vunpack.c.l.b16 %v136
    %v176 = vunpack.c.l.b16 %v137
    %v177 = vunpack.c.l.b16 %v138
    %v178 = vunpack.c.l.b16 %v139
    %v179 = vunpack.c.l.b16 %v140
    %v180 = vunpack.c.l.b16 %v141
    %v181 = vunpack.c.l.b16 %v142
    %v182 = vunpack.c.l.b16 %v143
    %v183 = vunpack.c.l.b16 %v144
    %v184 = vunpack.c.l.b16 %v145
    %v185 = vunpack.c.l.b16 %v146
    %v186 = vunpack.c.l.b16 %v147
    %v187 = vpack.c.b16 %v172, %v171
    %v188 = vpack.c.b16 %v174, %v173
    %v189 = vpack.c.b16 %v176, %v175
    %v190 = vpack.c.b16 %v178, %v177
    %v191 = vpack.c.b16 %v180, %v179
    %v192 = vpack.c.b16 %v182, %v181
    %v193 = vpack.c.b16 %v184, %v183
    %v194 = vpack.c.b16 %v186, %v185
    %203 = vmatprep.subr.bf16.mxu0 0
    %204 = vmatpush1.bf16.msra.mxu0 %v187
    %205 = vmatprep.subr.bf16.mxu0 0
    %206 = vmatpush1.bf16.msra.mxu0 %v188
    %207 = vmatprep.subr.bf16.mxu0 0
    %208 = vmatpush1.bf16.msra.mxu0 %v189
    %209 = vmatprep.subr.bf16.mxu0 0
    %210 = vmatpush1.bf16.msra.mxu0 %v190
    %211 = vmatprep.subr.bf16.mxu0 0
    %212 = vmatpush1.bf16.msra.mxu0 %v191
    %213 = vmatprep.subr.bf16.mxu0 0
    %214 = vmatpush1.bf16.msra.mxu0 %v192
    %215 = vmatprep.subr.bf16.mxu0 0
    %216 = vmatpush1.bf16.msra.mxu0 %v193
    %217 = vmatprep.subr.bf16.mxu0 0
    %218 = vmatpush1.bf16.msra.mxu0 %v194
    %219 = vmatprep.subr.bf16.mxu0 0
    %220 = vmatpush1.bf16.msra.mxu0 0
    %221 = vmatprep.subr.bf16.mxu0 0
    %222 = vmatpush1.bf16.msra.mxu0 0
    %223 = vmatprep.subr.bf16.mxu0 0
    %224 = vmatpush1.bf16.msra.mxu0 0
    %225 = vmatprep.subr.bf16.mxu0 0
    %226 = vmatpush1.bf16.msra.mxu0 0
    %227 = vmatprep.subr.bf16.mxu0 0
    %228 = vmatpush1.bf16.msra.mxu0 0
    %229 = vmatprep.subr.bf16.mxu0 0
    %230 = vmatpush1.bf16.msra.mxu0 0
    %231 = vmatprep.subr.bf16.mxu0 0
    %232 = vmatpush1.bf16.msra.mxu0 0
    %233 = vmatprep.subr.bf16.mxu0 0
    %234 = vmatpush1.bf16.msra.mxu0 0
    %235 = vmatprep.mubr.bf16.mxu0 0
    %236 = vmatmul.mubr.bf16.gmra.mrb[0].mxu0 %v131
    %v237 = vpop.f32.mrb[0].mxu0
    %v238 = vadd.f32 %v153, %v237
    %v239 = vpop.f32.mrb[0].mxu0
    %v240 = vpop.f32.mrb[0].mxu0
    %v241 = vpop.f32.mrb[0].mxu0
    %242 = vdwg.mxu0
    %243 = vst [vmem:[#allocation8] sm:$0xff] %v238
    // Predicated region
    $region34: #{tpu_custom_call.1} parent=1 // pred_check
      _
    $region35: #{tpu_custom_call.1} parent=1 // pred_check_branch
      %245 = sbr.rel (0) target = $region37
    $region36: #{tpu_custom_call.1} parent=1 // pred_region
      %s247 = ssub.s32 128, 128
      %248 = vsyncadd [#allocation4], %s247
      %s250 = sshll.u32 [#allocation8], 4
      %s251 = int_to_ptr.vmem [resolvable:$true] %s250
      %253 = dma.vmem_to_hbm [thread:$0]  %s251, 128, %s5, [#allocation4]
    $region37: #{tpu_custom_call.1} parent=1 // pred_fallthru
      _
    // Predicated region
    $region38: #{tpu_custom_call.1} parent=1 // pred_check
      _
    $region39: #{tpu_custom_call.1} parent=1 // pred_check_branch
      %255 = sbr.rel (0) target = $region41
    $region40: #{tpu_custom_call.1} parent=1 // pred_region
      %256 = dma.done [#allocation4], 128
    $region41: #{tpu_custom_call.1} parent=1 // pred_fallthru
      _
    %257 = vsyncpa [#allocation3], 1
    %258 = vsyncpa [#allocation6], 1
    %259 = vsyncpa [#allocation4], 1

</llo_original>
